<compile_context>
chip_gen: v6e
topology: v6e:2x2x1
jax: 0.10.0
libtpu: 0.0.40
codegen_flags: <defaults>
</compile_context>

<pallas_src>
import functools

import numpy as np
import jax
import jax.numpy as jnp
from jax.experimental import pallas as pl
from jax.experimental.pallas import tpu as pltpu


def _round_up(x, m):
    return ((x + m - 1) // m) * m


def prepare_params(params, filter_sizes, *, emb_dtype=jnp.bfloat16, lane=128):
    """One-time weight prep: per-tap fused conv weights, lane-dense padding,
    and an extra all-zero embedding row used as the pad token."""
    emb = np.asarray(params['embedding'], np.float32)
    V, E = emb.shape
    F = int(params[f'conv{filter_sizes[0]}_w'].shape[0])
    n_fs = len(filter_sizes)
    C = n_fs * F
    c_pad = _round_up(max(C, lane), lane)
    max_fs = max(filter_sizes)
    O = int(params['fc_w'].shape[0])
    o_pad = _round_up(max(O, lane), lane)

    # Embedding + one zero row at index V: padded token ids gather zeros, so
    # no separate jnp.pad pass over the gathered activations is needed.
    emb_p = np.zeros((V + 1, E), np.float32)
    emb_p[:V] = emb

    # Per-tap conv weights: wconv[j, :, ci*F + f] = conv_ci weight at tap j
    # (zero where j >= fs or the column is lane padding).  The column layout
    # is shared with the FC weight, so the "concat" of pooled outputs is
    # implicit.
    wconv = np.zeros((max_fs, E, c_pad), np.float32)
    bconv = np.zeros((1, c_pad), np.float32)
    for ci, fs in enumerate(filter_sizes):
        w = np.asarray(params[f'conv{fs}_w'], np.float32)   # (F, 1, fs, E)
        b = np.asarray(params[f'conv{fs}_b'], np.float32)   # (F,)
        col0 = ci * F
        for j in range(fs):
            wconv[j, :, col0:col0 + F] = w[:, 0, j, :].T
        bconv[0, col0:col0 + F] = b

    # FC weight laid out to match the pooled column layout, zero-padded to
    # (c_pad, o_pad) so the output store is lane-dense.
    wfc = np.zeros((c_pad, o_pad), np.float32)
    wfc[:C, :O] = np.asarray(params['fc_w'], np.float32).T
    bfc = np.zeros((1, o_pad), np.float32)
    bfc[0, :O] = np.asarray(params['fc_b'], np.float32)

    return {
        'embedding': jnp.asarray(emb_p, emb_dtype),
        'wconv': jnp.asarray(wconv),      # f32 (tiny; matmul acc is f32)
        'bconv': jnp.asarray(bconv),      # f32
        'wfc': jnp.asarray(wfc),          # f32
        'bfc': jnp.asarray(bfc),          # f32
    }


def make_cnn_kernel(*, s_out, max_fs, c_pad):
    """Refs: emb (tb, s_emb, E) [bf16/f32], wconv (max_fs, E, c_pad) f32,
    biasmask (s_out, c_pad) f32, wfc (c_pad, o_pad) f32, bfc (1, o_pad) f32
    -> out (tb, o_pad) f32."""

    def kernel(emb_ref, wconv_ref, bm_ref, wfc_ref, bfc_ref, out_ref):
        tb, _, e = emb_ref.shape
        # Upcast the small embedding tile once; all slicing / accumulation /
        # elementwise work stays f32 (v5e-safe, and bf16 only pays for DMA).
        x = emb_ref[...].astype(jnp.float32)              # (tb, s_emb, E)

        # conv[b, t, c] = sum_j emb[b, t+j, :] @ wconv[j][:, c]
        # One small MXU matmul per tap on a time-shifted slice of the tile;
        # no wide zero-padded intermediate is ever materialized.
        acc = None
        for j in range(max_fs):
            xj = x[:, j:j + s_out, :].reshape(tb * s_out, e)
            yj = jnp.dot(xj, wconv_ref[j],
                         preferred_element_type=jnp.float32)  # (tb*s_out, c_pad)
            acc = yj if acc is None else acc + yj

        conv = acc.reshape(tb, s_out, c_pad)
        # Fused bias + (-1e30) validity mask, then ReLU.  Masked positions
        # clamp to 0 and, since every valid ReLU value is >= 0, they can
        # never win the max-over-time (and every filter has >= 1 valid
        # position because S >= max filter size is asserted outside).
        conv = jnp.maximum(conv + bm_ref[...], 0.0)
        pooled = jnp.max(conv, axis=1)                    # (tb, c_pad)

        # FC: pooled column layout already matches wfc rows (implicit concat).
        out_ref[...] = (jnp.dot(pooled, wfc_ref[...],
                                preferred_element_type=jnp.float32)
                        + bfc_ref[...])
    return kernel


def cnn_forward(text, prep, *, filter_sizes, n_filters, output_dim,
                block_b=512):
    """text: (B, S) int32 token ids. Returns (B, output_dim) float32 logits."""
    B, S = text.shape
    max_fs = max(filter_sizes)
    min_fs = min(filter_sizes)
    if S < max_fs:
        raise ValueError(
            f"seq_len={S} must be >= max filter size {max_fs} "
            "(same constraint as the PyTorch module).")
    F = n_filters
    Vp1, E = prep['embedding'].shape
    wmax_fs, _, c_pad = prep['wconv'].shape
    assert wmax_fs == max_fs
    o_pad = prep['wfc'].shape[1]

    # Time sizing (single rounding): s_out covers the longest conv output,
    # s_emb covers every embedding row any tap reads.
    s_out = _round_up(S - min_fs + 1, 8)
    s_emb = _round_up(max(S, s_out + max_fs - 1), 8)
    assert s_emb >= s_out + max_fs - 1  # shifted slices never read past s_emb

    # Batch tiling: at least 2 grid steps whenever B > 8 so ("parallel",)
    # actually splits work across both TensorCores on v7x; tb stays a
    # multiple of 8 (sublane constraint on the output block).
    tb = min(block_b, max(8, _round_up((B + 1) // 2, 8)))
    b_pad = _round_up(B, tb)

    # Pad token ids with the zero-embedding pad row (index Vp1-1); the gather
    # then directly yields the kernel-shaped activation -> no extra HBM pass.
    pad_id = Vp1 - 1
    ids = jnp.pad(text.astype(jnp.int32),
                  ((0, b_pad - B), (0, s_emb - S)),
                  constant_values=pad_id)
    emb = jnp.take(prep['embedding'], ids, axis=0)        # (b_pad, s_emb, E)

    # Fused bias + additive -1e30 mask on invalid conv positions (constant
    # layout at trace time; one tiny add outside the kernel).
    mask = np.zeros((s_out, c_pad), np.float32)
    for ci, fs in enumerate(filter_sizes):
        mask[S - fs + 1:, ci * F:(ci + 1) * F] = -1e30
    biasmask = prep['bconv'] + jnp.asarray(mask)          # (s_out, c_pad)

    kernel = make_cnn_kernel(s_out=s_out, max_fs=max_fs, c_pad=c_pad)

    out = pl.pallas_call(
        kernel,
        out_shape=jax.ShapeDtypeStruct((b_pad, o_pad), jnp.float32),
        grid_spec=pltpu.PrefetchScalarGridSpec(
            num_scalar_prefetch=0,
            grid=(b_pad // tb,),
            in_specs=[
                pl.BlockSpec((tb, s_emb, E), lambda b: (b, 0, 0)),
                pl.BlockSpec((max_fs, E, c_pad), lambda b: (0, 0, 0)),
                pl.BlockSpec((s_out, c_pad), lambda b: (0, 0)),
                pl.BlockSpec((c_pad, o_pad), lambda b: (0, 0)),
                pl.BlockSpec((1, o_pad), lambda b: (0, 0)),
            ],
            out_specs=pl.BlockSpec((tb, o_pad), lambda b: (b, 0)),
        ),
        compiler_params=pltpu.CompilerParams(
            dimension_semantics=("parallel",),   # batch tiles -> 2 TCs on v7x
            vmem_limit_bytes=32 * 1024 * 1024,   # footprint ~4 MB at tb=512
        ),
    )(emb, prep['wconv'], biasmask, prep['wfc'], prep['bfc'])

    return out[:B, :output_dim]


def reference_forward(text, params, filter_sizes):
    """Pure-JAX f32 reference mirroring the PyTorch module semantics."""
    emb = jnp.take(params['embedding'], text, axis=0)  # (B, S, E)
    B, S, E = emb.shape
    pooled = []
    for fs in filter_sizes:
        w = params[f'conv{fs}_w']                      # (F, 1, fs, E)
        b = params[f'conv{fs}_b']                      # (F,)
        L = S - fs + 1
        F = w.shape[0]
        conv = jnp.zeros((B, F, L), jnp.float32)
        for t in range(L):
            win = emb[:, t:t + fs, :].reshape(B, fs * E)
            conv = conv.at[:, :, t].set(win @ w.reshape(F, fs * E).T + b)
        conv = jnp.maximum(conv, 0.0)
        pooled.append(jnp.max(conv, axis=2))           # (B, F)
    cat = jnp.concatenate(pooled, axis=1)
    return cat @ params['fc_w'].T + params['fc_b']


if __name__ == "__main__":
    char_size = 30
    embedding_dim = 32
    n_filters = 8
    filter_sizes = (2, 3, 4)
    output_dim = 4
    batch = 2
    seq_len = 8

    key = jax.random.PRNGKey(0)
    keys = jax.random.split(key, 16)

    params = {
        'embedding': jax.random.normal(keys[0], (char_size, embedding_dim),
                                       jnp.float32),
        'fc_w': 0.1 * jax.random.normal(
            keys[1], (output_dim, len(filter_sizes) * n_filters), jnp.float32),
        'fc_b': 0.1 * jax.random.normal(keys[2], (output_dim,), jnp.float32),
    }
    for i, fs in enumerate(filter_sizes):
        params[f'conv{fs}_w'] = 0.1 * jax.random.normal(
            keys[3 + 2 * i], (n_filters, 1, fs, embedding_dim), jnp.float32)
        params[f'conv{fs}_b'] = 0.1 * jax.random.normal(
            keys[4 + 2 * i], (n_filters,), jnp.float32)

    text = jax.random.randint(keys[15], (batch, seq_len), 0, char_size,
                              dtype=jnp.int32)

    ref = reference_forward(text, params, filter_sizes)

    # f32 embedding path: tight numerical parity check against the reference.
    prep32 = prepare_params(params, filter_sizes, emb_dtype=jnp.float32)
    fwd = jax.jit(functools.partial(
        cnn_forward, filter_sizes=filter_sizes, n_filters=n_filters,
        output_dim=output_dim))
    out32 = jax.block_until_ready(fwd(text, prep32))
    assert out32.shape == (batch, output_dim)
    assert jnp.allclose(out32, ref, atol=1e-4, rtol=1e-4), (out32, ref)

    # bf16 embedding DMA path (default): bf16 gather/DMA, f32 accumulation
    # and elementwise inside the kernel.
    prep16 = prepare_params(params, filter_sizes, emb_dtype=jnp.bfloat16)
    out16 = jax.block_until_ready(fwd(text, prep16))
    assert out16.shape == (batch, output_dim)
    assert jnp.allclose(out16, ref, atol=1e-1, rtol=1e-1), (out16, ref)

    print("KERNEL_OK")
</pallas_src>

<mosaic_0001>
module attributes {stable_mosaic.version = 11 : i64} {
  func.func @kernel(%arg0: i32, %arg1: memref<8x16x32xf32, #tpu.memory_space<vmem>>, %arg2: memref<4x32x128xf32, #tpu.memory_space<vmem>>, %arg3: memref<8x128xf32, #tpu.memory_space<vmem>>, %arg4: memref<128x128xf32, #tpu.memory_space<vmem>>, %arg5: memref<1x128xf32, #tpu.memory_space<vmem>>, %arg6: memref<8x128xf32, #tpu.memory_space<vmem>>) attributes {dimension_semantics = [#tpu.dimension_semantics<parallel>], iteration_bounds = array<i64: 1>, scalar_prefetch = 0 : i64, scratch_operands = 0 : i64, tpu.core_type = #tpu.core_type<tc>, window_params = [{transform_indices = @transform_0, window_bounds = array<i64: 8, 16, 32>}, {pipeline_mode = #tpu.pipeline_mode<synchronous>, transform_indices = @transform_1, window_bounds = array<i64: 4, 32, 128>}, {pipeline_mode = #tpu.pipeline_mode<synchronous>, transform_indices = @transform_2, window_bounds = array<i64: 8, 128>}, {pipeline_mode = #tpu.pipeline_mode<synchronous>, transform_indices = @transform_3, window_bounds = array<i64: 128, 128>}, {pipeline_mode = #tpu.pipeline_mode<synchronous>, transform_indices = @transform_4, window_bounds = array<i64: 1, 128>}, {transform_indices = @transform_5, window_bounds = array<i64: 8, 128>}]} {
    %c0 = arith.constant 0 : index
    %c0_0 = arith.constant 0 : index
    %c0_1 = arith.constant 0 : index
    %0 = vector.load %arg1[%c0, %c0_0, %c0_1] : memref<8x16x32xf32, #tpu.memory_space<vmem>>, vector<8x16x32xf32>
    %1 = vector.extract_strided_slice %0 {offsets = [0, 0, 0], sizes = [8, 8, 32], strides = [1, 1, 1]} : vector<8x16x32xf32> to vector<8x8x32xf32>
    %2 = vector.shape_cast %1 : vector<8x8x32xf32> to vector<64x32xf32>
    %c0_2 = arith.constant 0 : index
    %c0_3 = arith.constant 0 : index
    %c0_4 = arith.constant 0 : index
    %3 = vector.load %arg2[%c0_2, %c0_3, %c0_4] : memref<4x32x128xf32, #tpu.memory_space<vmem>>, vector<1x32x128xf32>
    %4 = vector.shape_cast %3 : vector<1x32x128xf32> to vector<32x128xf32>
    %cst = arith.constant dense<0.000000e+00> : vector<64x128xf32>
    %5 = tpu.matmul %2, %4, %cst {dimension_numbers = #tpu.dot_dimension_numbers<[1], [0], [0], [1], [0, 0, 1, 1], [], []>} : vector<64x32xf32>, vector<32x128xf32>, vector<64x128xf32> -> vector<64x128xf32>
    %6 = vector.extract_strided_slice %0 {offsets = [0, 1, 0], sizes = [8, 8, 32], strides = [1, 1, 1]} : vector<8x16x32xf32> to vector<8x8x32xf32>
    %7 = vector.shape_cast %6 : vector<8x8x32xf32> to vector<64x32xf32>
    %c1 = arith.constant 1 : index
    %c0_5 = arith.constant 0 : index
    %c0_6 = arith.constant 0 : index
    %8 = vector.load %arg2[%c1, %c0_5, %c0_6] : memref<4x32x128xf32, #tpu.memory_space<vmem>>, vector<1x32x128xf32>
    %9 = vector.shape_cast %8 : vector<1x32x128xf32> to vector<32x128xf32>
    %cst_7 = arith.constant dense<0.000000e+00> : vector<64x128xf32>
    %10 = tpu.matmul %7, %9, %cst_7 {dimension_numbers = #tpu.dot_dimension_numbers<[1], [0], [0], [1], [0, 0, 1, 1], [], []>} : vector<64x32xf32>, vector<32x128xf32>, vector<64x128xf32> -> vector<64x128xf32>
    %11 = arith.addf %5, %10 : vector<64x128xf32>
    %12 = vector.extract_strided_slice %0 {offsets = [0, 2, 0], sizes = [8, 8, 32], strides = [1, 1, 1]} : vector<8x16x32xf32> to vector<8x8x32xf32>
    %13 = vector.shape_cast %12 : vector<8x8x32xf32> to vector<64x32xf32>
    %c2 = arith.constant 2 : index
    %c0_8 = arith.constant 0 : index
    %c0_9 = arith.constant 0 : index
    %14 = vector.load %arg2[%c2, %c0_8, %c0_9] : memref<4x32x128xf32, #tpu.memory_space<vmem>>, vector<1x32x128xf32>
    %15 = vector.shape_cast %14 : vector<1x32x128xf32> to vector<32x128xf32>
    %cst_10 = arith.constant dense<0.000000e+00> : vector<64x128xf32>
    %16 = tpu.matmul %13, %15, %cst_10 {dimension_numbers = #tpu.dot_dimension_numbers<[1], [0], [0], [1], [0, 0, 1, 1], [], []>} : vector<64x32xf32>, vector<32x128xf32>, vector<64x128xf32> -> vector<64x128xf32>
    %17 = arith.addf %11, %16 : vector<64x128xf32>
    %18 = vector.extract_strided_slice %0 {offsets = [0, 3, 0], sizes = [8, 8, 32], strides = [1, 1, 1]} : vector<8x16x32xf32> to vector<8x8x32xf32>
    %19 = vector.shape_cast %18 : vector<8x8x32xf32> to vector<64x32xf32>
    %c3 = arith.constant 3 : index
    %c0_11 = arith.constant 0 : index
    %c0_12 = arith.constant 0 : index
    %20 = vector.load %arg2[%c3, %c0_11, %c0_12] : memref<4x32x128xf32, #tpu.memory_space<vmem>>, vector<1x32x128xf32>
    %21 = vector.shape_cast %20 : vector<1x32x128xf32> to vector<32x128xf32>
    %cst_13 = arith.constant dense<0.000000e+00> : vector<64x128xf32>
    %22 = tpu.matmul %19, %21, %cst_13 {dimension_numbers = #tpu.dot_dimension_numbers<[1], [0], [0], [1], [0, 0, 1, 1], [], []>} : vector<64x32xf32>, vector<32x128xf32>, vector<64x128xf32> -> vector<64x128xf32>
    %23 = arith.addf %17, %22 : vector<64x128xf32>
    %24 = vector.shape_cast %23 : vector<64x128xf32> to vector<8x8x128xf32>
    %c0_14 = arith.constant 0 : index
    %c0_15 = arith.constant 0 : index
    %25 = vector.load %arg3[%c0_14, %c0_15] : memref<8x128xf32, #tpu.memory_space<vmem>>, vector<8x128xf32>
    %26 = vector.shape_cast %25 : vector<8x128xf32> to vector<1x8x128xf32>
    %27 = vector.broadcast %26 : vector<1x8x128xf32> to vector<8x8x128xf32>
    %28 = arith.addf %24, %27 : vector<8x8x128xf32>
    %cst_16 = arith.constant 0.000000e+00 : f32
    %29 = vector.broadcast %cst_16 : f32 to vector<8x8x128xf32>
    %30 = arith.maximumf %28, %29 : vector<8x8x128xf32>
    %cst_17 = arith.constant dense<0xFF800000> : vector<8x128xf32>
    %31 = vector.multi_reduction <maximumf>, %30, %cst_17 [1] : vector<8x8x128xf32> to vector<8x128xf32>
    %c0_18 = arith.constant 0 : index
    %c0_19 = arith.constant 0 : index
    %32 = vector.load %arg4[%c0_18, %c0_19] : memref<128x128xf32, #tpu.memory_space<vmem>>, vector<128x128xf32>
    %cst_20 = arith.constant dense<0.000000e+00> : vector<8x128xf32>
    %33 = tpu.matmul %31, %32, %cst_20 {dimension_numbers = #tpu.dot_dimension_numbers<[1], [0], [0], [1], [0, 0, 1, 1], [], []>} : vector<8x128xf32>, vector<128x128xf32>, vector<8x128xf32> -> vector<8x128xf32>
    %c0_21 = arith.constant 0 : index
    %c0_22 = arith.constant 0 : index
    %34 = vector.load %arg5[%c0_21, %c0_22] : memref<1x128xf32, #tpu.memory_space<vmem>>, vector<1x128xf32>
    %35 = vector.broadcast %34 : vector<1x128xf32> to vector<8x128xf32>
    %36 = arith.addf %33, %35 : vector<8x128xf32>
    %c0_23 = arith.constant 0 : index
    %c0_24 = arith.constant 0 : index
    %37 = vector.load %arg6[%c0_23, %c0_24] : memref<8x128xf32, #tpu.memory_space<vmem>>, vector<8x128xf32>
    tpu.vector_store %arg6[%c0_23, %c0_24], %36 {strides = array<i32>} : memref<8x128xf32, #tpu.memory_space<vmem>>, vector<8x128xf32>,
    return
  }
  func.func @transform_0(%arg0: i32) -> (i32, i32, i32) {
    %c0_i32 = arith.constant 0 : i32
    %c0_i32_0 = arith.constant 0 : i32
    %c0_i32_1 = arith.constant 0 : i32
    return %arg0, %c0_i32, %c0_i32_0 : i32, i32, i32
  }
  func.func @transform_1(%arg0: i32) -> (i32, i32, i32) {
    %c0_i32 = arith.constant 0 : i32
    %c0_i32_0 = arith.constant 0 : i32
    %c0_i32_1 = arith.constant 0 : i32
    %c0_i32_2 = arith.constant 0 : i32
    return %c0_i32, %c0_i32_0, %c0_i32_1 : i32, i32, i32
  }
  func.func @transform_2(%arg0: i32) -> (i32, i32) {
    %c0_i32 = arith.constant 0 : i32
    %c0_i32_0 = arith.constant 0 : i32
    %c0_i32_1 = arith.constant 0 : i32
    return %c0_i32, %c0_i32_0 : i32, i32
  }
  func.func @transform_3(%arg0: i32) -> (i32, i32) {
    %c0_i32 = arith.constant 0 : i32
    %c0_i32_0 = arith.constant 0 : i32
    %c0_i32_1 = arith.constant 0 : i32
    return %c0_i32, %c0_i32_0 : i32, i32
  }
  func.func @transform_4(%arg0: i32) -> (i32, i32) {
    %c0_i32 = arith.constant 0 : i32
    %c0_i32_0 = arith.constant 0 : i32
    %c0_i32_1 = arith.constant 0 : i32
    return %c0_i32, %c0_i32_0 : i32, i32
  }
  func.func @transform_5(%arg0: i32) -> (i32, i32) {
    %c0_i32 = arith.constant 0 : i32
    %c0_i32_0 = arith.constant 0 : i32
    return %arg0, %c0_i32 : i32, i32
  }
}

</mosaic_0001>

<llo_original>
// kernel: cnn_forward.1
$region0: #{cnn_forward.1}
  #allocation0 [shape = 'u32[]', space=smem, size = 0x4, offset = 0x4, fixed_abs, tag = 'smem constant byte address 0x4 - core index']
  #allocation1 [shape = 'u32[144,128]{1,0:T(1,128)}', space=vmem, size = 0x12000, scoped, tag = 'internal scratch']
  %s0 = inlined_call_operand.vmem [shape: f32[8,16,32], index: 0, kind: input, shape index: {}]
  %s1 = inlined_call_operand.vmem [shape: f32[4,32,128], index: 1, kind: input, shape index: {}]
  %s2 = inlined_call_operand.vmem [shape: f32[8,128], index: 2, kind: input, shape index: {}]
  %s3 = inlined_call_operand.vmem [shape: f32[128,128], index: 3, kind: input, shape index: {}]
  %s4 = inlined_call_operand.vmem [shape: f32[1,128], index: 4, kind: input, shape index: {}]
  %s5 = inlined_call_operand.vmem [shape: f32[8,128], index: 5, kind: output, shape index: {}]
  %s6 = sld [smem:[#allocation0]]
  $region30: #{cnn_forward.1} parent=0
    _
  %s8 = ssub.s32 1, %s6
  %s9 = scalar_select 0, %s8, %s6
  // Predicated region
  $region2: #{cnn_forward.1} parent=0 // pred_check
    _
  $region3: #{cnn_forward.1} parent=0 // pred_check_branch
    %11 = sbr.rel (0) target = $region5
  $region4: #{cnn_forward.1} parent=0 // pred_region
    _
  $region5: #{cnn_forward.1} parent=0 // pred_fallthru
    _
  // Predicated region
  $region6: #{cnn_forward.1} parent=0 // pred_check
    _
  $region7: #{cnn_forward.1} parent=0 // pred_check_branch
    %13 = sbr.rel (0) target = $region9
  $region8: #{cnn_forward.1} parent=0 // pred_region
    _
  $region9: #{cnn_forward.1} parent=0 // pred_fallthru
    _
  // Predicated region
  $region10: #{cnn_forward.1} parent=0 // pred_check
    _
  $region11: #{cnn_forward.1} parent=0 // pred_check_branch
    %15 = sbr.rel (0) target = $region13
  $region12: #{cnn_forward.1} parent=0 // pred_region
    _
  $region13: #{cnn_forward.1} parent=0 // pred_fallthru
    _
  // Predicated region
  $region14: #{cnn_forward.1} parent=0 // pred_check
    _
  $region15: #{cnn_forward.1} parent=0 // pred_check_branch
    %17 = sbr.rel (0) target = $region17
  $region16: #{cnn_forward.1} parent=0 // pred_region
    _
  $region17: #{cnn_forward.1} parent=0 // pred_fallthru
    _
  // Predicated region
  $region18: #{cnn_forward.1} parent=0 // pred_check
    _
  $region19: #{cnn_forward.1} parent=0 // pred_check_branch
    %19 = sbr.rel (0) target = $region21
  $region20: #{cnn_forward.1} parent=0 // pred_region
    _
  $region21: #{cnn_forward.1} parent=0 // pred_fallthru
    _
  %v20 = vld [vmem:[%s0] sm:$0xff]
  %v21 = vld [vmem:[%s0 + $0x8] sm:$0xff]
  %v22 = vld [vmem:[%s0 + $0x10] sm:$0xff]
  %v23 = vld [vmem:[%s0 + $0x18] sm:$0xff]
  %v24 = vld [vmem:[%s0 + $0x20] sm:$0xff]
  %v25 = vld [vmem:[%s0 + $0x28] sm:$0xff]
  %v26 = vld [vmem:[%s0 + $0x30] sm:$0xff]
  %v27 = vld [vmem:[%s0 + $0x38] sm:$0xff]
  %v28 = vld [vmem:[%s0 + $0x40] sm:$0xff]
  %v29 = vld [vmem:[%s0 + $0x48] sm:$0xff]
  %v30 = vld [vmem:[%s0 + $0x50] sm:$0xff]
  %v31 = vld [vmem:[%s0 + $0x58] sm:$0xff]
  %v32 = vld [vmem:[%s0 + $0x60] sm:$0xff]
  %v33 = vld [vmem:[%s0 + $0x68] sm:$0xff]
  %v34 = vld [vmem:[%s0 + $0x70] sm:$0xff]
  %v35 = vld [vmem:[%s0 + $0x78] sm:$0xff]
  %v36 = vld [vmem:[%s1] sm:$0xff]
  %v37 = vld [vmem:[%s1 + $0x8] sm:$0xff]
  %v38 = vld [vmem:[%s1 + $0x10] sm:$0xff]
  %v39 = vld [vmem:[%s1 + $0x18] sm:$0xff]
  %vm56 = vcmask 1046528
  %v57 = vrot.slane %v20, 1
  %v58 = vrot.slane %v21, 1
  %v59 = vsel %vm56, %v57, %v58
  %v60 = vrot.slane %v22, 1
  %v61 = vrot.slane %v23, 1
  %v62 = vsel %vm56, %v60, %v61
  %v63 = vrot.slane %v24, 1
  %v64 = vrot.slane %v25, 1
  %v65 = vsel %vm56, %v63, %v64
  %v66 = vrot.slane %v26, 1
  %v67 = vrot.slane %v27, 1
  %v68 = vsel %vm56, %v66, %v67
  %v69 = vrot.slane %v28, 1
  %v70 = vrot.slane %v29, 1
  %v71 = vsel %vm56, %v69, %v70
  %v72 = vrot.slane %v30, 1
  %v73 = vrot.slane %v31, 1
  %v74 = vsel %vm56, %v72, %v73
  %v75 = vrot.slane %v32, 1
  %v76 = vrot.slane %v33, 1
  %v77 = vsel %vm56, %v75, %v76
  %v78 = vrot.slane %v34, 1
  %v79 = vrot.slane %v35, 1
  %v80 = vsel %vm56, %v78, %v79
  %s81 = scalar_lea.vmem %s1, 32
  %v82 = vld [vmem:[%s81] sm:$0xff]
  %v83 = vld [vmem:[%s81 + $0x8] sm:$0xff]
  %v84 = vld [vmem:[%s81 + $0x10] sm:$0xff]
  %v85 = vld [vmem:[%s81 + $0x18] sm:$0xff]
  %vm86 = vcmask 261120
  %v87 = vsel %vm86, %v59, 0
  %v89 = vsel %vm86, %v62, 0
  %v91 = vsel %vm86, %v65, 0
  %v93 = vsel %vm86, %v68, 0
  %v95 = vsel %vm86, %v71, 0
  %v97 = vsel %vm86, %v74, 0
  %v99 = vsel %vm86, %v77, 0
  %v101 = vsel %vm86, %v80, 0
  %103 = vmatprep.subr.mxu0 0.0
  %104 = vmatpush1.msra.mxu0 0.0
  %105 = vmatprep.subr.mxu0 0.0
  %106 = vmatpush1.msra.mxu0 0.0
  %107 = vmatprep.subr.mxu0 0.0
  %108 = vmatpush1.msra.mxu0 0.0
  %109 = vmatprep.subr.mxu0 0.0
  %110 = vmatpush1.msra.mxu0 0.0
  %111 = vmatprep.subr.mxu0 0.0
  %112 = vmatpush1.msra.mxu0 0.0
  %113 = vmatprep.subr.mxu0 0.0
  %114 = vmatpush1.msra.mxu0 0.0
  %115 = vmatprep.subr.mxu0 0.0
  %116 = vmatpush1.msra.mxu0 0.0
  %117 = vmatprep.subr.mxu0 0.0
  %118 = vmatpush1.msra.mxu0 0.0
  %119 = vmatprep.subr.mxu0 0.0
  %120 = vmatpush1.msra.mxu0 0.0
  %121 = vmatprep.subr.mxu0 0.0
  %122 = vmatpush1.msra.mxu0 0.0
  %123 = vmatprep.subr.mxu0 0.0
  %124 = vmatpush1.msra.mxu0 0.0
  %125 = vmatprep.subr.mxu0 0.0
  %126 = vmatpush1.msra.mxu0 0.0
  %127 = vmatprep.subr.mxu0 0.0
  %128 = vmatpush1.msra.mxu0 %v85
  %129 = vmatprep.subr.mxu0 0.0
  %130 = vmatpush1.msra.mxu0 %v84
  %131 = vmatprep.subr.mxu0 0.0
  %132 = vmatpush1.msra.mxu0 %v83
  %133 = vmatprep.subr.mxu0 0.0
  %134 = vmatpush1.msra.mxu0 %v82
  %135 = vmatprep.subr.mxu0 0.0
  %136 = vmatpush2.msra.mxu0 0.0
  %137 = vmatprep.subr.mxu0 0.0
  %138 = vmatpush2.msra.mxu0 0.0
  %139 = vmatprep.subr.mxu0 0.0
  %140 = vmatpush2.msra.mxu0 0.0
  %141 = vmatprep.subr.mxu0 0.0
  %142 = vmatpush2.msra.mxu0 0.0
  %143 = vmatprep.subr.mxu0 0.0
  %144 = vmatpush2.msra.mxu0 0.0
  %145 = vmatprep.subr.mxu0 0.0
  %146 = vmatpush2.msra.mxu0 0.0
  %147 = vmatprep.subr.mxu0 0.0
  %148 = vmatpush2.msra.mxu0 0.0
  %149 = vmatprep.subr.mxu0 0.0
  %150 = vmatpush2.msra.mxu0 0.0
  %151 = vmatprep.subr.mxu0 0.0
  %152 = vmatpush2.msra.mxu0 0.0
  %153 = vmatprep.subr.mxu0 0.0
  %154 = vmatpush2.msra.mxu0 0.0
  %155 = vmatprep.subr.mxu0 0.0
  %156 = vmatpush2.msra.mxu0 0.0
  %157 = vmatprep.subr.mxu0 0.0
  %158 = vmatpush2.msra.mxu0 0.0
  %159 = vmatprep.subr.mxu0 0.0
  %160 = vmatpush2.msra.mxu0 0.0
  %161 = vmatprep.subr.mxu0 0.0
  %162 = vmatpush2.msra.mxu0 0.0
  %163 = vmatprep.subr.mxu0 0.0
  %164 = vmatpush2.msra.mxu0 0.0
  %165 = vmatprep.subr.mxu0 0.0
  %166 = vmatpush2.msra.mxu0 0.0
  %167 = vmatprep.mubr.f32.mxu0 0.0
  %168 = vmatmul.mubr.f32.gmra.mxu0 %v87
  %v169 = vpop.f32.mrf.mxu0
  %v170 = vadd.f32 0.0, %v169
  %v171 = vpop.f32.mrf.mxu0
  %172 = vmatprep.mubr.f32.mxu0 0.0
  %173 = vmatmul.mubr.f32.gmra.mxu0 %v89
  %v174 = vpop.f32.mrf.mxu0
  %v175 = vadd.f32 0.0, %v174
  %v176 = vpop.f32.mrf.mxu0
  %177 = vmatprep.mubr.f32.mxu0 0.0
  %178 = vmatmul.mubr.f32.gmra.mxu0 %v91
  %v179 = vpop.f32.mrf.mxu0
  %v180 = vadd.f32 0.0, %v179
  %v181 = vpop.f32.mrf.mxu0
  %182 = vmatprep.mubr.f32.mxu0 0.0
  %183 = vmatmul.mubr.f32.gmra.mxu0 %v93
  %v184 = vpop.f32.mrf.mxu0
  %v185 = vadd.f32 0.0, %v184
  %v186 = vpop.f32.mrf.mxu0
  %187 = vmatprep.mubr.f32.mxu0 0.0
  %188 = vmatmul.mubr.f32.gmra.mxu0 %v95
  %v189 = vpop.f32.mrf.mxu0
  %v190 = vadd.f32 0.0, %v189
  %v191 = vpop.f32.mrf.mxu0
  %192 = vmatprep.mubr.f32.mxu0 0.0
  %193 = vmatmul.mubr.f32.gmra.mxu0 %v97
  %v194 = vpop.f32.mrf.mxu0
  %v195 = vadd.f32 0.0, %v194
  %v196 = vpop.f32.mrf.mxu0
  %197 = vmatprep.mubr.f32.mxu0 0.0
  %198 = vmatmul.mubr.f32.gmra.mxu0 %v99
  %v199 = vpop.f32.mrf.mxu0
  %v200 = vadd.f32 0.0, %v199
  %v201 = vpop.f32.mrf.mxu0
  %202 = vmatprep.mubr.f32.mxu0 0.0
  %203 = vmatmul.mubr.f32.gmra.mxu0 %v101
  %v204 = vpop.f32.mrf.mxu0
  %v205 = vadd.f32 0.0, %v204
  %v206 = vpop.f32.mrf.mxu0
  %207 = vdwg.mxu0
  %v208 = vsel %vm86, %v20, 0
  %v210 = vsel %vm86, %v22, 0
  %v212 = vsel %vm86, %v24, 0
  %v214 = vsel %vm86, %v26, 0
  %v216 = vsel %vm86, %v28, 0
  %v218 = vsel %vm86, %v30, 0
  %v220 = vsel %vm86, %v32, 0
  %v222 = vsel %vm86, %v34, 0
  %224 = vmatprep.subr.mxu0 0.0
  %225 = vmatpush1.msra.mxu0 0.0
  %226 = vmatprep.subr.mxu0 0.0
  %227 = vmatpush1.msra.mxu0 0.0
  %228 = vmatprep.subr.mxu0 0.0
  %229 = vmatpush1.msra.mxu0 0.0
  %230 = vmatprep.subr.mxu0 0.0
  %231 = vmatpush1.msra.mxu0 0.0
  %232 = vmatprep.subr.mxu0 0.0
  %233 = vmatpush1.msra.mxu0 0.0
  %234 = vmatprep.subr.mxu0 0.0
  %235 = vmatpush1.msra.mxu0 0.0
  %236 = vmatprep.subr.mxu0 0.0
  %237 = vmatpush1.msra.mxu0 0.0
  %238 = vmatprep.subr.mxu0 0.0
  %239 = vmatpush1.msra.mxu0 0.0
  %240 = vmatprep.subr.mxu0 0.0
  %241 = vmatpush1.msra.mxu0 0.0
  %242 = vmatprep.subr.mxu0 0.0
  %243 = vmatpush1.msra.mxu0 0.0
  %244 = vmatprep.subr.mxu0 0.0
  %245 = vmatpush1.msra.mxu0 0.0
  %246 = vmatprep.subr.mxu0 0.0
  %247 = vmatpush1.msra.mxu0 0.0
  %248 = vmatprep.subr.mxu0 0.0
  %249 = vmatpush1.msra.mxu0 %v39
  %250 = vmatprep.subr.mxu0 0.0
  %251 = vmatpush1.msra.mxu0 %v38
  %252 = vmatprep.subr.mxu0 0.0
  %253 = vmatpush1.msra.mxu0 %v37
  %254 = vmatprep.subr.mxu0 0.0
  %255 = vmatpush1.msra.mxu0 %v36
  %256 = vmatprep.subr.mxu0 0.0
  %257 = vmatpush2.msra.mxu0 0.0
  %258 = vmatprep.subr.mxu0 0.0
  %259 = vmatpush2.msra.mxu0 0.0
  %260 = vmatprep.subr.mxu0 0.0
  %261 = vmatpush2.msra.mxu0 0.0
  %262 = vmatprep.subr.mxu0 0.0
  %263 = vmatpush2.msra.mxu0 0.0
  %264 = vmatprep.subr.mxu0 0.0
  %265 = vmatpush2.msra.mxu0 0.0
  %266 = vmatprep.subr.mxu0 0.0
  %267 = vmatpush2.msra.mxu0 0.0
  %268 = vmatprep.subr.mxu0 0.0
  %269 = vmatpush2.msra.mxu0 0.0
  %270 = vmatprep.subr.mxu0 0.0
  %271 = vmatpush2.msra.mxu0 0.0
  %272 = vmatprep.subr.mxu0 0.0
  %273 = vmatpush2.msra.mxu0 0.0
  %274 = vmatprep.subr.mxu0 0.0
  %275 = vmatpush2.msra.mxu0 0.0
  %276 = vmatprep.subr.mxu0 0.0
  %277 = vmatpush2.msra.mxu0 0.0
  %278 = vmatprep.subr.mxu0 0.0
  %279 = vmatpush2.msra.mxu0 0.0
  %280 = vmatprep.subr.mxu0 0.0
  %281 = vmatpush2.msra.mxu0 0.0
  %282 = vmatprep.subr.mxu0 0.0
  %283 = vmatpush2.msra.mxu0 0.0
  %284 = vmatprep.subr.mxu0 0.0
  %285 = vmatpush2.msra.mxu0 0.0
  %286 = vmatprep.subr.mxu0 0.0
  %287 = vmatpush2.msra.mxu0 0.0
  %288 = vmatprep.mubr.f32.mxu0 0.0
  %289 = vmatmul.mubr.f32.gmra.mxu0 %v208
  %v290 = vpop.f32.mrf.mxu0
  %v291 = vadd.f32 %v170, %v290
  %v292 = vpop.f32.mrf.mxu0
  %293 = vmatprep.mubr.f32.mxu0 0.0
  %294 = vmatmul.mubr.f32.gmra.mxu0 %v210
  %v295 = vpop.f32.mrf.mxu0
  %v296 = vadd.f32 %v175, %v295
  %v297 = vpop.f32.mrf.mxu0
  %298 = vmatprep.mubr.f32.mxu0 0.0
  %299 = vmatmul.mubr.f32.gmra.mxu0 %v212
  %v300 = vpop.f32.mrf.mxu0
  %v301 = vadd.f32 %v180, %v300
  %v302 = vpop.f32.mrf.mxu0
  %303 = vmatprep.mubr.f32.mxu0 0.0
  %304 = vmatmul.mubr.f32.gmra.mxu0 %v214
  %v305 = vpop.f32.mrf.mxu0
  %v306 = vadd.f32 %v185, %v305
  %v307 = vpop.f32.mrf.mxu0
  %308 = vmatprep.mubr.f32.mxu0 0.0
  %309 = vmatmul.mubr.f32.gmra.mxu0 %v216
  %v310 = vpop.f32.mrf.mxu0
  %v311 = vadd.f32 %v190, %v310
  %v312 = vpop.f32.mrf.mxu0
  %313 = vmatprep.mubr.f32.mxu0 0.0
  %314 = vmatmul.mubr.f32.gmra.mxu0 %v218
  %v315 = vpop.f32.mrf.mxu0
  %v316 = vadd.f32 %v195, %v315
  %v317 = vpop.f32.mrf.mxu0
  %318 = vmatprep.mubr.f32.mxu0 0.0
  %319 = vmatmul.mubr.f32.gmra.mxu0 %v220
  %v320 = vpop.f32.mrf.mxu0
  %v321 = vadd.f32 %v200, %v320
  %v322 = vpop.f32.mrf.mxu0
  %323 = vmatprep.mubr.f32.mxu0 0.0
  %324 = vmatmul.mubr.f32.gmra.mxu0 %v222
  %v325 = vpop.f32.mrf.mxu0
  %v326 = vadd.f32 %v205, %v325
  %v327 = vpop.f32.mrf.mxu0
  %328 = vdwg.mxu0
  %vm329 = vcmask 1045504
  %v330 = vrot.slane %v20, 2
  %v331 = vrot.slane %v21, 2
  %v332 = vsel %vm329, %v330, %v331
  %v333 = vrot.slane %v22, 2
  %v334 = vrot.slane %v23, 2
  %v335 = vsel %vm329, %v333, %v334
  %v336 = vrot.slane %v24, 2
  %v337 = vrot.slane %v25, 2
  %v338 = vsel %vm329, %v336, %v337
  %v339 = vrot.slane %v26, 2
  %v340 = vrot.slane %v27, 2
  %v341 = vsel %vm329, %v339, %v340
  %v342 = vrot.slane %v28, 2
  %v343 = vrot.slane %v29, 2
  %v344 = vsel %vm329, %v342, %v343
  %v345 = vrot.slane %v30, 2
  %v346 = vrot.slane %v31, 2
  %v347 = vsel %vm329, %v345, %v346
  %v348 = vrot.slane %v32, 2
  %v349 = vrot.slane %v33, 2
  %v350 = vsel %vm329, %v348, %v349
  %v351 = vrot.slane %v34, 2
  %v352 = vrot.slane %v35, 2
  %v353 = vsel %vm329, %v351, %v352
  %s354 = scalar_lea.vmem %s1, 64
  %v355 = vld [vmem:[%s354] sm:$0xff]
  %v356 = vld [vmem:[%s354 + $0x8] sm:$0xff]
  %v357 = vld [vmem:[%s354 + $0x10] sm:$0xff]
  %v358 = vld [vmem:[%s354 + $0x18] sm:$0xff]
  %v359 = vsel %vm86, %v332, 0
  %v361 = vsel %vm86, %v335, 0
  %v363 = vsel %vm86, %v338, 0
  %v365 = vsel %vm86, %v341, 0
  %v367 = vsel %vm86, %v344, 0
  %v369 = vsel %vm86, %v347, 0
  %v371 = vsel %vm86, %v350, 0
  %v373 = vsel %vm86, %v353, 0
  %375 = vmatprep.subr.mxu0 0.0
  %376 = vmatpush1.msra.mxu0 0.0
  %377 = vmatprep.subr.mxu0 0.0
  %378 = vmatpush1.msra.mxu0 0.0
  %379 = vmatprep.subr.mxu0 0.0
  %380 = vmatpush1.msra.mxu0 0.0
  %381 = vmatprep.subr.mxu0 0.0
  %382 = vmatpush1.msra.mxu0 0.0
  %383 = vmatprep.subr.mxu0 0.0
  %384 = vmatpush1.msra.mxu0 0.0
  %385 = vmatprep.subr.mxu0 0.0
  %386 = vmatpush1.msra.mxu0 0.0
  %387 = vmatprep.subr.mxu0 0.0
  %388 = vmatpush1.msra.mxu0 0.0
  %389 = vmatprep.subr.mxu0 0.0
  %390 = vmatpush1.msra.mxu0 0.0
  %391 = vmatprep.subr.mxu0 0.0
  %392 = vmatpush1.msra.mxu0 0.0
  %393 = vmatprep.subr.mxu0 0.0
  %394 = vmatpush1.msra.mxu0 0.0
  %395 = vmatprep.subr.mxu0 0.0
  %396 = vmatpush1.msra.mxu0 0.0
  %397 = vmatprep.subr.mxu0 0.0
  %398 = vmatpush1.msra.mxu0 0.0
  %399 = vmatprep.subr.mxu0 0.0
  %400 = vmatpush1.msra.mxu0 %v358
  %401 = vmatprep.subr.mxu0 0.0
  %402 = vmatpush1.msra.mxu0 %v357
  %403 = vmatprep.subr.mxu0 0.0
  %404 = vmatpush1.msra.mxu0 %v356
  %405 = vmatprep.subr.mxu0 0.0
  %406 = vmatpush1.msra.mxu0 %v355
  %407 = vmatprep.subr.mxu0 0.0
  %408 = vmatpush2.msra.mxu0 0.0
  %409 = vmatprep.subr.mxu0 0.0
  %410 = vmatpush2.msra.mxu0 0.0
  %411 = vmatprep.subr.mxu0 0.0
  %412 = vmatpush2.msra.mxu0 0.0
  %413 = vmatprep.subr.mxu0 0.0
  %414 = vmatpush2.msra.mxu0 0.0
  %415 = vmatprep.subr.mxu0 0.0
  %416 = vmatpush2.msra.mxu0 0.0
  %417 = vmatprep.subr.mxu0 0.0
  %418 = vmatpush2.msra.mxu0 0.0
  %419 = vmatprep.subr.mxu0 0.0
  %420 = vmatpush2.msra.mxu0 0.0
  %421 = vmatprep.subr.mxu0 0.0
  %422 = vmatpush2.msra.mxu0 0.0
  %423 = vmatprep.subr.mxu0 0.0
  %424 = vmatpush2.msra.mxu0 0.0
  %425 = vmatprep.subr.mxu0 0.0
  %426 = vmatpush2.msra.mxu0 0.0
  %427 = vmatprep.subr.mxu0 0.0
  %428 = vmatpush2.msra.mxu0 0.0
  %429 = vmatprep.subr.mxu0 0.0
  %430 = vmatpush2.msra.mxu0 0.0
  %431 = vmatprep.subr.mxu0 0.0
  %432 = vmatpush2.msra.mxu0 0.0
  %433 = vmatprep.subr.mxu0 0.0
  %434 = vmatpush2.msra.mxu0 0.0
  %435 = vmatprep.subr.mxu0 0.0
  %436 = vmatpush2.msra.mxu0 0.0
  %437 = vmatprep.subr.mxu0 0.0
  %438 = vmatpush2.msra.mxu0 0.0
  %439 = vmatprep.mubr.f32.mxu0 0.0
  %440 = vmatmul.mubr.f32.gmra.mxu0 %v359
  %v441 = vpop.f32.mrf.mxu0
  %v442 = vadd.f32 0.0, %v441
  %v443 = vpop.f32.mrf.mxu0
  %444 = vmatprep.mubr.f32.mxu0 0.0
  %445 = vmatmul.mubr.f32.gmra.mxu0 %v361
  %v446 = vpop.f32.mrf.mxu0
  %v447 = vadd.f32 0.0, %v446
  %v448 = vpop.f32.mrf.mxu0
  %449 = vmatprep.mubr.f32.mxu0 0.0
  %450 = vmatmul.mubr.f32.gmra.mxu0 %v363
  %v451 = vpop.f32.mrf.mxu0
  %v452 = vadd.f32 0.0, %v451
  %v453 = vpop.f32.mrf.mxu0
  %454 = vmatprep.mubr.f32.mxu0 0.0
  %455 = vmatmul.mubr.f32.gmra.mxu0 %v365
  %v456 = vpop.f32.mrf.mxu0
  %v457 = vadd.f32 0.0, %v456
  %v458 = vpop.f32.mrf.mxu0
  %459 = vmatprep.mubr.f32.mxu0 0.0
  %460 = vmatmul.mubr.f32.gmra.mxu0 %v367
  %v461 = vpop.f32.mrf.mxu0
  %v462 = vadd.f32 0.0, %v461
  %v463 = vpop.f32.mrf.mxu0
  %464 = vmatprep.mubr.f32.mxu0 0.0
  %465 = vmatmul.mubr.f32.gmra.mxu0 %v369
  %v466 = vpop.f32.mrf.mxu0
  %v467 = vadd.f32 0.0, %v466
  %v468 = vpop.f32.mrf.mxu0
  %469 = vmatprep.mubr.f32.mxu0 0.0
  %470 = vmatmul.mubr.f32.gmra.mxu0 %v371
  %v471 = vpop.f32.mrf.mxu0
  %v472 = vadd.f32 0.0, %v471
  %v473 = vpop.f32.mrf.mxu0
  %474 = vmatprep.mubr.f32.mxu0 0.0
  %475 = vmatmul.mubr.f32.gmra.mxu0 %v373
  %v476 = vpop.f32.mrf.mxu0
  %v477 = vadd.f32 0.0, %v476
  %v478 = vpop.f32.mrf.mxu0
  %479 = vdwg.mxu0
  %v480 = vadd.f32 %v291, %v442
  %v481 = vadd.f32 %v296, %v447
  %v482 = vadd.f32 %v301, %v452
  %v483 = vadd.f32 %v306, %v457
  %v484 = vadd.f32 %v311, %v462
  %v485 = vadd.f32 %v316, %v467
  %v486 = vadd.f32 %v321, %v472
  %v487 = vadd.f32 %v326, %v477
  %vm488 = vcmask 1044480
  %v489 = vrot.slane %v20, 3
  %v490 = vrot.slane %v21, 3
  %v491 = vsel %vm488, %v489, %v490
  %v492 = vrot.slane %v22, 3
  %v493 = vrot.slane %v23, 3
  %v494 = vsel %vm488, %v492, %v493
  %v495 = vrot.slane %v24, 3
  %v496 = vrot.slane %v25, 3
  %v497 = vsel %vm488, %v495, %v496
  %v498 = vrot.slane %v26, 3
  %v499 = vrot.slane %v27, 3
  %v500 = vsel %vm488, %v498, %v499
  %v501 = vrot.slane %v28, 3
  %v502 = vrot.slane %v29, 3
  %v503 = vsel %vm488, %v501, %v502
  %v504 = vrot.slane %v30, 3
  %v505 = vrot.slane %v31, 3
  %v506 = vsel %vm488, %v504, %v505
  %v507 = vrot.slane %v32, 3
  %v508 = vrot.slane %v33, 3
  %v509 = vsel %vm488, %v507, %v508
  %v510 = vrot.slane %v34, 3
  %v511 = vrot.slane %v35, 3
  %v512 = vsel %vm488, %v510, %v511
  %s513 = scalar_lea.vmem %s1, 96
  %v514 = vld [vmem:[%s513] sm:$0xff]
  %v515 = vld [vmem:[%s513 + $0x8] sm:$0xff]
  %v516 = vld [vmem:[%s513 + $0x10] sm:$0xff]
  %v517 = vld [vmem:[%s513 + $0x18] sm:$0xff]
  %v518 = vsel %vm86, %v491, 0
  %v520 = vsel %vm86, %v494, 0
  %v522 = vsel %vm86, %v497, 0
  %v524 = vsel %vm86, %v500, 0
  %v526 = vsel %vm86, %v503, 0
  %v528 = vsel %vm86, %v506, 0
  %v530 = vsel %vm86, %v509, 0
  %v532 = vsel %vm86, %v512, 0
  %534 = vmatprep.subr.mxu0 0.0
  %535 = vmatpush1.msra.mxu0 0.0
  %536 = vmatprep.subr.mxu0 0.0
  %537 = vmatpush1.msra.mxu0 0.0
  %538 = vmatprep.subr.mxu0 0.0
  %539 = vmatpush1.msra.mxu0 0.0
  %540 = vmatprep.subr.mxu0 0.0
  %541 = vmatpush1.msra.mxu0 0.0
  %542 = vmatprep.subr.mxu0 0.0
  %543 = vmatpush1.msra.mxu0 0.0
  %544 = vmatprep.subr.mxu0 0.0
  %545 = vmatpush1.msra.mxu0 0.0
  %546 = vmatprep.subr.mxu0 0.0
  %547 = vmatpush1.msra.mxu0 0.0
  %548 = vmatprep.subr.mxu0 0.0
  %549 = vmatpush1.msra.mxu0 0.0
  %550 = vmatprep.subr.mxu0 0.0
  %551 = vmatpush1.msra.mxu0 0.0
  %552 = vmatprep.subr.mxu0 0.0
  %553 = vmatpush1.msra.mxu0 0.0
  %554 = vmatprep.subr.mxu0 0.0
  %555 = vmatpush1.msra.mxu0 0.0
  %556 = vmatprep.subr.mxu0 0.0
  %557 = vmatpush1.msra.mxu0 0.0
  %558 = vmatprep.subr.mxu0 0.0
  %559 = vmatpush1.msra.mxu0 %v517
  %560 = vmatprep.subr.mxu0 0.0
  %561 = vmatpush1.msra.mxu0 %v516
  %562 = vmatprep.subr.mxu0 0.0
  %563 = vmatpush1.msra.mxu0 %v515
  %564 = vmatprep.subr.mxu0 0.0
  %565 = vmatpush1.msra.mxu0 %v514
  %566 = vmatprep.subr.mxu0 0.0
  %567 = vmatpush2.msra.mxu0 0.0
  %568 = vmatprep.subr.mxu0 0.0
  %569 = vmatpush2.msra.mxu0 0.0
  %570 = vmatprep.subr.mxu0 0.0
  %571 = vmatpush2.msra.mxu0 0.0
  %572 = vmatprep.subr.mxu0 0.0
  %573 = vmatpush2.msra.mxu0 0.0
  %574 = vmatprep.subr.mxu0 0.0
  %575 = vmatpush2.msra.mxu0 0.0
  %576 = vmatprep.subr.mxu0 0.0
  %577 = vmatpush2.msra.mxu0 0.0
  %578 = vmatprep.subr.mxu0 0.0
  %579 = vmatpush2.msra.mxu0 0.0
  %580 = vmatprep.subr.mxu0 0.0
  %581 = vmatpush2.msra.mxu0 0.0
  %582 = vmatprep.subr.mxu0 0.0
  %583 = vmatpush2.msra.mxu0 0.0
  %584 = vmatprep.subr.mxu0 0.0
  %585 = vmatpush2.msra.mxu0 0.0
  %586 = vmatprep.subr.mxu0 0.0
  %587 = vmatpush2.msra.mxu0 0.0
  %588 = vmatprep.subr.mxu0 0.0
  %589 = vmatpush2.msra.mxu0 0.0
  %590 = vmatprep.subr.mxu0 0.0
  %591 = vmatpush2.msra.mxu0 0.0
  %592 = vmatprep.subr.mxu0 0.0
  %593 = vmatpush2.msra.mxu0 0.0
  %594 = vmatprep.subr.mxu0 0.0
  %595 = vmatpush2.msra.mxu0 0.0
  %596 = vmatprep.subr.mxu0 0.0
  %597 = vmatpush2.msra.mxu0 0.0
  %598 = vmatprep.mubr.f32.mxu0 0.0
  %599 = vmatmul.mubr.f32.gmra.mxu0 %v518
  %v600 = vpop.f32.mrf.mxu0
  %v601 = vadd.f32 0.0, %v600
  %v602 = vpop.f32.mrf.mxu0
  %603 = vmatprep.mubr.f32.mxu0 0.0
  %604 = vmatmul.mubr.f32.gmra.mxu0 %v520
  %v605 = vpop.f32.mrf.mxu0
  %v606 = vadd.f32 0.0, %v605
  %v607 = vpop.f32.mrf.mxu0
  %608 = vmatprep.mubr.f32.mxu0 0.0
  %609 = vmatmul.mubr.f32.gmra.mxu0 %v522
  %v610 = vpop.f32.mrf.mxu0
  %v611 = vadd.f32 0.0, %v610
  %v612 = vpop.f32.mrf.mxu0
  %613 = vmatprep.mubr.f32.mxu0 0.0
  %614 = vmatmul.mubr.f32.gmra.mxu0 %v524
  %v615 = vpop.f32.mrf.mxu0
  %v616 = vadd.f32 0.0, %v615
  %v617 = vpop.f32.mrf.mxu0
  %618 = vmatprep.mubr.f32.mxu0 0.0
  %619 = vmatmul.mubr.f32.gmra.mxu0 %v526
  %v620 = vpop.f32.mrf.mxu0
  %v621 = vadd.f32 0.0, %v620
  %v622 = vpop.f32.mrf.mxu0
  %623 = vmatprep.mubr.f32.mxu0 0.0
  %624 = vmatmul.mubr.f32.gmra.mxu0 %v528
  %v625 = vpop.f32.mrf.mxu0
  %v626 = vadd.f32 0.0, %v625
  %v627 = vpop.f32.mrf.mxu0
  %628 = vmatprep.mubr.f32.mxu0 0.0
  %629 = vmatmul.mubr.f32.gmra.mxu0 %v530
  %v630 = vpop.f32.mrf.mxu0
  %v631 = vadd.f32 0.0, %v630
  %v632 = vpop.f32.mrf.mxu0
  %633 = vmatprep.mubr.f32.mxu0 0.0
  %634 = vmatmul.mubr.f32.gmra.mxu0 %v532
  %v635 = vpop.f32.mrf.mxu0
  %v636 = vadd.f32 0.0, %v635
  %v637 = vpop.f32.mrf.mxu0
  %638 = vdwg.mxu0
  %v639 = vadd.f32 %v480, %v601
  %v640 = vadd.f32 %v481, %v606
  %v641 = vadd.f32 %v482, %v611
  %v642 = vadd.f32 %v483, %v616
  %v643 = vadd.f32 %v484, %v621
  %v644 = vadd.f32 %v485, %v626
  %v645 = vadd.f32 %v486, %v631
  %v646 = vadd.f32 %v487, %v636
  %v647 = vld [vmem:[%s2] sm:$0xff]
  %v648 = vadd.f32 %v639, %v647
  %v649 = vadd.f32 %v640, %v647
  %v650 = vadd.f32 %v641, %v647
  %v651 = vadd.f32 %v642, %v647
  %v652 = vadd.f32 %v643, %v647
  %v653 = vadd.f32 %v644, %v647
  %v654 = vadd.f32 %v645, %v647
  %v655 = vadd.f32 %v646, %v647
  %v656 = vmax.f32 %v648, 0.0
  %v657 = vmax.f32 %v649, 0.0
  %v658 = vmax.f32 %v650, 0.0
  %v659 = vmax.f32 %v651, 0.0
  %v660 = vmax.f32 %v652, 0.0
  %v661 = vmax.f32 %v653, 0.0
  %v662 = vmax.f32 %v654, 0.0
  %v663 = vmax.f32 %v655, 0.0
  %v664 = vrot.slane %v656, 4
  %v665 = vmax.f32 %v656, %v664
  %v666 = vrot.slane %v665, 2
  %v667 = vmax.f32 %v665, %v666
  %v668 = vrot.slane %v667, 1
  %v669 = vmax.f32 %v667, %v668
  %v670 = vrot.slane %v657, 4
  %v671 = vmax.f32 %v657, %v670
  %v672 = vrot.slane %v671, 2
  %v673 = vmax.f32 %v671, %v672
  %v674 = vrot.slane %v673, 1
  %v675 = vmax.f32 %v673, %v674
  %v676 = vrot.slane %v658, 4
  %v677 = vmax.f32 %v658, %v676
  %v678 = vrot.slane %v677, 2
  %v679 = vmax.f32 %v677, %v678
  %v680 = vrot.slane %v679, 1
  %v681 = vmax.f32 %v679, %v680
  %v682 = vrot.slane %v659, 4
  %v683 = vmax.f32 %v659, %v682
  %v684 = vrot.slane %v683, 2
  %v685 = vmax.f32 %v683, %v684
  %v686 = vrot.slane %v685, 1
  %v687 = vmax.f32 %v685, %v686
  %v688 = vrot.slane %v660, 4
  %v689 = vmax.f32 %v660, %v688
  %v690 = vrot.slane %v689, 2
  %v691 = vmax.f32 %v689, %v690
  %v692 = vrot.slane %v691, 1
  %v693 = vmax.f32 %v691, %v692
  %v694 = vrot.slane %v661, 4
  %v695 = vmax.f32 %v661, %v694
  %v696 = vrot.slane %v695, 2
  %v697 = vmax.f32 %v695, %v696
  %v698 = vrot.slane %v697, 1
  %v699 = vmax.f32 %v697, %v698
  %v700 = vrot.slane %v662, 4
  %v701 = vmax.f32 %v662, %v700
  %v702 = vrot.slane %v701, 2
  %v703 = vmax.f32 %v701, %v702
  %v704 = vrot.slane %v703, 1
  %v705 = vmax.f32 %v703, %v704
  %v706 = vrot.slane %v663, 4
  %v707 = vmax.f32 %v663, %v706
  %v708 = vrot.slane %v707, 2
  %v709 = vmax.f32 %v707, %v708
  %v710 = vrot.slane %v709, 1
  %v711 = vmax.f32 %v709, %v710
  %v712 = vld [vmem:[%s3] sm:$0xff]
  %v713 = vld [vmem:[%s3 + $0x8] sm:$0xff]
  %v714 = vld [vmem:[%s3 + $0x10] sm:$0xff]
  %v715 = vld [vmem:[%s3 + $0x18] sm:$0xff]
  %v716 = vld [vmem:[%s3 + $0x20] sm:$0xff]
  %v717 = vld [vmem:[%s3 + $0x28] sm:$0xff]
  %v718 = vld [vmem:[%s3 + $0x30] sm:$0xff]
  %v719 = vld [vmem:[%s3 + $0x38] sm:$0xff]
  %v720 = vld [vmem:[%s3 + $0x40] sm:$0xff]
  %v721 = vld [vmem:[%s3 + $0x48] sm:$0xff]
  %v722 = vld [vmem:[%s3 + $0x50] sm:$0xff]
  %v723 = vld [vmem:[%s3 + $0x58] sm:$0xff]
  %v724 = vld [vmem:[%s3 + $0x60] sm:$0xff]
  %v725 = vld [vmem:[%s3 + $0x68] sm:$0xff]
  %v726 = vld [vmem:[%s3 + $0x70] sm:$0xff]
  %v727 = vld [vmem:[%s3 + $0x78] sm:$0xff]
  %v728 = vld [vmem:[%s4] sm:$0x1]
  %v730 = vlaneseq
  %v731 = vshrl.u32 %v730, 7
  %v732 = vsub.s32 0, %v731
  %v733 = vrot.slane %v728, %v732
  %vm743 = vcmask 1041409
  %v744 = vsel %vm743, %v675, %v669
  %vm745 = vcmask 1042434
  %v746 = vsel %vm745, %v681, %v744
  %vm747 = vcmask 1043459
  %v748 = vsel %vm747, %v687, %v746
  %vm749 = vcmask 1044484
  %v750 = vsel %vm749, %v693, %v748
  %vm751 = vcmask 1045509
  %v752 = vsel %vm751, %v699, %v750
  %vm753 = vcmask 1046534
  %v754 = vsel %vm753, %v705, %v752
  %vm755 = vcmask 1047559
  %v756 = vsel %vm755, %v711, %v754
  %758 = vmatprep.subr.mxu0 0.0
  %759 = vmatpush1.msra.mxu0 %v727
  %760 = vmatprep.subr.mxu0 0.0
  %761 = vmatpush1.msra.mxu0 %v726
  %762 = vmatprep.subr.mxu0 0.0
  %763 = vmatpush1.msra.mxu0 %v725
  %764 = vmatprep.subr.mxu0 0.0
  %765 = vmatpush1.msra.mxu0 %v724
  %766 = vmatprep.subr.mxu0 0.0
  %767 = vmatpush1.msra.mxu0 %v723
  %768 = vmatprep.subr.mxu0 0.0
  %769 = vmatpush1.msra.mxu0 %v722
  %770 = vmatprep.subr.mxu0 0.0
  %771 = vmatpush1.msra.mxu0 %v721
  %772 = vmatprep.subr.mxu0 0.0
  %773 = vmatpush1.msra.mxu0 %v720
  %774 = vmatprep.subr.mxu0 0.0
  %775 = vmatpush1.msra.mxu0 %v719
  %776 = vmatprep.subr.mxu0 0.0
  %777 = vmatpush1.msra.mxu0 %v718
  %778 = vmatprep.subr.mxu0 0.0
  %779 = vmatpush1.msra.mxu0 %v717
  %780 = vmatprep.subr.mxu0 0.0
  %781 = vmatpush1.msra.mxu0 %v716
  %782 = vmatprep.subr.mxu0 0.0
  %783 = vmatpush1.msra.mxu0 %v715
  %784 = vmatprep.subr.mxu0 0.0
  %785 = vmatpush1.msra.mxu0 %v714
  %786 = vmatprep.subr.mxu0 0.0
  %787 = vmatpush1.msra.mxu0 %v713
  %788 = vmatprep.subr.mxu0 0.0
  %789 = vmatpush1.msra.mxu0 %v712
  %790 = vmatprep.subr.mxu0 0.0
  %791 = vmatpush2.msra.mxu0 0.0
  %792 = vmatprep.subr.mxu0 0.0
  %793 = vmatpush2.msra.mxu0 0.0
  %794 = vmatprep.subr.mxu0 0.0
  %795 = vmatpush2.msra.mxu0 0.0
  %796 = vmatprep.subr.mxu0 0.0
  %797 = vmatpush2.msra.mxu0 0.0
  %798 = vmatprep.subr.mxu0 0.0
  %799 = vmatpush2.msra.mxu0 0.0
  %800 = vmatprep.subr.mxu0 0.0
  %801 = vmatpush2.msra.mxu0 0.0
  %802 = vmatprep.subr.mxu0 0.0
  %803 = vmatpush2.msra.mxu0 0.0
  %804 = vmatprep.subr.mxu0 0.0
  %805 = vmatpush2.msra.mxu0 0.0
  %806 = vmatprep.subr.mxu0 0.0
  %807 = vmatpush2.msra.mxu0 0.0
  %808 = vmatprep.subr.mxu0 0.0
  %809 = vmatpush2.msra.mxu0 0.0
  %810 = vmatprep.subr.mxu0 0.0
  %811 = vmatpush2.msra.mxu0 0.0
  %812 = vmatprep.subr.mxu0 0.0
  %813 = vmatpush2.msra.mxu0 0.0
  %814 = vmatprep.subr.mxu0 0.0
  %815 = vmatpush2.msra.mxu0 0.0
  %816 = vmatprep.subr.mxu0 0.0
  %817 = vmatpush2.msra.mxu0 0.0
  %818 = vmatprep.subr.mxu0 0.0
  %819 = vmatpush2.msra.mxu0 0.0
  %820 = vmatprep.subr.mxu0 0.0
  %821 = vmatpush2.msra.mxu0 0.0
  %822 = vmatprep.mubr.f32.mxu0 0.0
  %823 = vmatmul.mubr.f32.gmra.mxu0 %v756
  %v824 = vpop.f32.mrf.mxu0
  %v825 = vadd.f32 %v733, %v824
  %v826 = vpop.f32.mrf.mxu0
  %827 = vdwg.mxu0
  %828 = vst [vmem:[%s5] sm:$0xff] %v825
  // Predicated region
  $region22: #{cnn_forward.1} parent=0 // pred_check
    _
  $region23: #{cnn_forward.1} parent=0 // pred_check_branch
    %830 = sbr.rel (0) target = $region25
  $region24: #{cnn_forward.1} parent=0 // pred_region
    _
  $region25: #{cnn_forward.1} parent=0 // pred_fallthru
    _
  // Predicated region
  $region26: #{cnn_forward.1} parent=0 // pred_check
    _
  $region27: #{cnn_forward.1} parent=0 // pred_check_branch
    %832 = sbr.rel (0) target = $region29
  $region28: #{cnn_forward.1} parent=0 // pred_region
    _
  $region29: #{cnn_forward.1} parent=0 // pred_fallthru
    _

</llo_original>
